<compile_context>
chip_gen: v7x
topology: tpu7x:2x2x1
jax: 0.10.0
libtpu: 0.0.40
codegen_flags: <defaults>
</compile_context>

<pallas_src>
import math

import jax
import jax.numpy as jnp
from jax.experimental import pallas as pl
from jax.experimental.pallas import tpu as pltpu


def _round_up(n: int, m: int) -> int:
    return ((n + m - 1) // m) * m


def _build_pe_table(embed_size: int, max_seq: int = 5000) -> jnp.ndarray:
    """Sinusoidal PE table, shape (max_seq, embed_size), float32.

    NOTE: for odd embed_size the cos half is truncated to embed_size // 2
    columns (PyTorch's canonical snippet would error on odd sizes).
    """
    pos = jnp.arange(max_seq, dtype=jnp.float32)[:, None]                 # (max_seq, 1)
    div = jnp.exp(jnp.arange(0, embed_size, 2, dtype=jnp.float32)
                  * (-math.log(10000.0) / embed_size))                    # (ceil(E/2),)
    angles = pos * div                                                    # (max_seq, ceil(E/2))
    pe = jnp.zeros((max_seq, embed_size), dtype=jnp.float32)
    pe = pe.at[:, 0::2].set(jnp.sin(angles))
    pe = pe.at[:, 1::2].set(jnp.cos(angles)[:, : embed_size // 2])
    return pe


def _vmem_capacity_bytes() -> int:
    try:
        return int(pltpu.get_tpu_info().vmem_capacity_bytes)
    except Exception:  # off-TPU / API fallback: assume the smaller (v7x) VMEM
        return 64 << 20


def _pos_add_3d_kernel(x_ref, pe_ref, o_ref):
    # x (TS, B, E) any dtype; pe (TS, 1, E) float32.
    # Batch broadcast = cheap sublane replicate; compute in f32, cast result only.
    o_ref[...] = (x_ref[...].astype(jnp.float32) + pe_ref[...]).astype(o_ref.dtype)


def _make_folded_kernel(batch: int):
    def kernel(x_ref, pe_ref, o_ref):
        # x (TS, B*E); pe (TS, E) float32.  Replicate pe across the batch along
        # lanes *inside* the kernel (whole-vreg copies since E % 128 == 0 on
        # this path) instead of paying B x the pe HBM traffic in the wrapper.
        pe = pe_ref[...]
        if batch > 1:
            pe = jnp.concatenate([pe] * batch, axis=-1)
        o_ref[...] = (x_ref[...].astype(jnp.float32) + pe).astype(o_ref.dtype)
    return kernel


# Below this element count a standalone pallas_call is slower than letting XLA
# fuse the broadcast-add into neighbouring ops (launch/step overhead dominates).
_SMALL_FALLBACK_ELEMS = 1 << 15


def pos_encoding(x: jnp.ndarray, pe_table: jnp.ndarray, *,
                 tile_bytes: int | None = None,
                 donate_x: bool = False,
                 small_fallback: bool = True) -> jnp.ndarray:
    """x: (S, B, E); pe_table: (max_seq, E) float32. Returns x + pe[:S] broadcast over B."""
    S, B, E = x.shape
    max_seq, e2 = pe_table.shape
    assert e2 == E, "pe_table embed dim mismatch"
    assert S <= max_seq, "sequence longer than the PE table"
    itemsize = jnp.dtype(x.dtype).itemsize

    # Tiny problems: let XLA fuse the broadcast-add instead of a standalone call.
    if small_fallback and S * B * E <= _SMALL_FALLBACK_ELEMS:
        return (x.astype(jnp.float32) + pe_table[:S][:, None, :]).astype(x.dtype)

    vmem_cap = _vmem_capacity_bytes()
    if tile_bytes is None:
        # v5e/v6e (128 MiB VMEM): big tiles amortize the ~0.35 us/step overhead.
        # v7x (64 MiB VMEM, 3.2 TB/s HBM): smaller tiles already hit roofline.
        tile_bytes = (8 << 20) if vmem_cap >= (96 << 20) else (2 << 20)

    folded = (E % 128 == 0) and (B % 8 != 0)

    if folded:
        # Fold (B, E) into lanes: last dim stays a multiple of 128 and a small /
        # unaligned B is not padded up to 8 sublanes (2x+ VMEM saving per tile).
        F = B * E
        xk = x.reshape(S, F)                                   # free metadata reshape
        pad_row = _round_up(F, 128) * itemsize
        TS = max(1, tile_bytes // pad_row)
        TS = min(TS, max(1, pl.cdiv(S, 8)))                    # >= ~8 grid steps (v7x megacore + pipelining)
        TS = min(TS, S)
        if S >= 8:
            TS = min(max(8, (TS // 8) * 8), (S // 8) * 8)      # sublane-aligned 2-D blocks
            pe_in = pe_table                                   # full table; blocks only touch first ~S rows
        else:
            TS = S                                             # tiny ragged S: full-extent blocks
            pe_in = pe_table[:S]
        grid = (pl.cdiv(S, TS),)
        in_specs = [pl.BlockSpec((TS, F), lambda s: (s, 0)),
                    pl.BlockSpec((TS, E), lambda s: (s, 0))]
        out_specs = pl.BlockSpec((TS, F), lambda s: (s, 0))
        out_shape = jax.ShapeDtypeStruct((S, F), x.dtype)
        kernel = _make_folded_kernel(B)
        x_tile_vmem = _round_up(TS, 8) * _round_up(F, 128) * itemsize
        pe_tile_vmem = _round_up(TS, 8) * _round_up(E, 128) * 4
    else:
        # Natural (S, B, E) layout with pe streamed as (TS, 1, E).  Used when
        # B % 8 == 0 (no sublane padding) and for unaligned E, where folding
        # would not make the lanes dense anyway.
        xk = x
        pad_row = _round_up(B, 8) * _round_up(E, 128) * itemsize
        TS = max(1, tile_bytes // pad_row)                     # size by *padded* VMEM footprint
        TS = min(TS, max(1, pl.cdiv(S, 8)))
        TS = min(TS, S)
        pe_in = pe_table.reshape(max_seq, 1, E)                # free metadata reshape, stays f32
        grid = (pl.cdiv(S, TS),)
        in_specs = [pl.BlockSpec((TS, B, E), lambda s: (s, 0, 0)),
                    pl.BlockSpec((TS, 1, E), lambda s: (s, 0, 0))]
        out_specs = pl.BlockSpec((TS, B, E), lambda s: (s, 0, 0))
        out_shape = jax.ShapeDtypeStruct((S, B, E), x.dtype)
        kernel = _pos_add_3d_kernel
        x_tile_vmem = TS * _round_up(B, 8) * _round_up(E, 128) * itemsize
        pe_tile_vmem = TS * 8 * _round_up(E, 128) * 4

    # x + out + pe, each double-buffered, plus slack; clamp to the chip's VMEM.
    vmem_need = 2 * (2 * x_tile_vmem + pe_tile_vmem) + (4 << 20)
    vmem_limit = max(16 << 20, vmem_need)
    vmem_limit = min(vmem_limit, max(32 << 20, (vmem_cap * 3) // 4))

    # TODO(synk): if xprof still shows exposed DMA at the chosen tile size,
    # add pipeline_mode=pl.Buffered(3) on the x/out specs instead of shrinking tiles.
    out = pl.pallas_call(
        kernel,
        grid=grid,
        out_shape=out_shape,
        in_specs=in_specs,
        out_specs=out_specs,
        input_output_aliases=({0: 0} if donate_x else {}),
        compiler_params=pltpu.CompilerParams(
            dimension_semantics=("parallel",),     # shard S-tiles across v7x's two TensorCores
            vmem_limit_bytes=int(vmem_limit),
        ),
        cost_estimate=pl.CostEstimate(
            flops=S * B * E,
            transcendentals=0,
            bytes_accessed=2 * S * B * E * itemsize + S * E * 4,
        ),
    )(xk, pe_in)

    return out.reshape(S, B, E)


if __name__ == "__main__":
    MAX_SEQ = 5000
    key = jax.random.PRNGKey(0)
    k1, k2, k3 = jax.random.split(key, 3)

    def ref(x, pe):
        s = x.shape[0]
        return (x.astype(jnp.float32) + pe[:s][:, None, :]).astype(x.dtype)

    # Case 1 — module's natural small shape: seq=8, batch=2, embed=32.
    # Unaligned E -> 3-D path; small_fallback=False forces the Pallas kernel.
    S1, B1, E1 = 8, 2, 32
    pe1 = _build_pe_table(E1, MAX_SEQ)
    x1 = jax.random.normal(k1, (S1, B1, E1), dtype=jnp.float32)
    o1 = jax.block_until_ready(pos_encoding(x1, pe1, small_fallback=False))
    assert o1.shape == (S1, B1, E1)
    assert jnp.allclose(o1, ref(x1, pe1), atol=1e-6, rtol=1e-6)

    # Case 2 — aligned E, B % 8 != 0 -> folded (S, B*E) path, in-kernel pe replication.
    S2, B2, E2 = 64, 4, 128
    pe2 = _build_pe_table(E2, MAX_SEQ)
    x2 = jax.random.normal(k2, (S2, B2, E2), dtype=jnp.float32)
    o2 = jax.block_until_ready(pos_encoding(x2, pe2, small_fallback=False))
    assert jnp.allclose(o2, ref(x2, pe2), atol=1e-6, rtol=1e-6)

    # Case 3 — aligned E, B % 8 == 0 -> 3-D path with sublane-broadcast pe.
    S3, B3, E3 = 16, 8, 128
    pe3 = _build_pe_table(E3, MAX_SEQ)
    x3 = jax.random.normal(k3, (S3, B3, E3), dtype=jnp.float32)
    o3 = jax.block_until_ready(pos_encoding(x3, pe3, small_fallback=False))
    assert jnp.allclose(o3, ref(x3, pe3), atol=1e-6, rtol=1e-6)

    # Case 4 — tiny-shape fused-XLA fallback (default behaviour).
    o4 = jax.block_until_ready(pos_encoding(x1, pe1))
    assert jnp.allclose(o4, ref(x1, pe1), atol=1e-6, rtol=1e-6)

    print("KERNEL_OK")
</pallas_src>

<mosaic_0001>
module attributes {stable_mosaic.version = 11 : i64} {
  func.func @_pos_add_3d_kernel(%arg0: i32, %arg1: memref<1x2x32xf32, #tpu.memory_space<vmem>>, %arg2: memref<1x1x32xf32, #tpu.memory_space<vmem>>, %arg3: memref<1x2x32xf32, #tpu.memory_space<vmem>>) attributes {dimension_semantics = [#tpu.dimension_semantics<parallel>], iteration_bounds = array<i64: 8>, scalar_prefetch = 0 : i64, scratch_operands = 0 : i64, tpu.core_type = #tpu.core_type<tc>, window_params = [{transform_indices = @transform_0, window_bounds = array<i64: 1, 2, 32>}, {transform_indices = @transform_1, window_bounds = array<i64: 1, 1, 32>}, {transform_indices = @transform_2, window_bounds = array<i64: 1, 2, 32>}]} {
    %c0 = arith.constant 0 : index
    %c0_0 = arith.constant 0 : index
    %c0_1 = arith.constant 0 : index
    %0 = vector.load %arg1[%c0, %c0_0, %c0_1] : memref<1x2x32xf32, #tpu.memory_space<vmem>>, vector<1x2x32xf32>
    %c0_2 = arith.constant 0 : index
    %c0_3 = arith.constant 0 : index
    %c0_4 = arith.constant 0 : index
    %1 = vector.load %arg2[%c0_2, %c0_3, %c0_4] : memref<1x1x32xf32, #tpu.memory_space<vmem>>, vector<1x1x32xf32>
    %2 = vector.broadcast %1 : vector<1x1x32xf32> to vector<1x2x32xf32>
    %3 = arith.addf %0, %2 : vector<1x2x32xf32>
    %c0_5 = arith.constant 0 : index
    %c0_6 = arith.constant 0 : index
    %c0_7 = arith.constant 0 : index
    %4 = vector.load %arg3[%c0_5, %c0_6, %c0_7] : memref<1x2x32xf32, #tpu.memory_space<vmem>>, vector<1x2x32xf32>
    tpu.vector_store %arg3[%c0_5, %c0_6, %c0_7], %3 {strides = array<i32>} : memref<1x2x32xf32, #tpu.memory_space<vmem>>, vector<1x2x32xf32>,
    return
  }
  func.func @transform_0(%arg0: i32) -> (i32, i32, i32) {
    %c0_i32 = arith.constant 0 : i32
    %c0_i32_0 = arith.constant 0 : i32
    %c0_i32_1 = arith.constant 0 : i32
    return %arg0, %c0_i32, %c0_i32_0 : i32, i32, i32
  }
  func.func @transform_1(%arg0: i32) -> (i32, i32, i32) {
    %c0_i32 = arith.constant 0 : i32
    %c0_i32_0 = arith.constant 0 : i32
    %c0_i32_1 = arith.constant 0 : i32
    return %arg0, %c0_i32, %c0_i32_0 : i32, i32, i32
  }
  func.func @transform_2(%arg0: i32) -> (i32, i32, i32) {
    %c0_i32 = arith.constant 0 : i32
    %c0_i32_0 = arith.constant 0 : i32
    %c0_i32_1 = arith.constant 0 : i32
    return %arg0, %c0_i32, %c0_i32_0 : i32, i32, i32
  }
}

</mosaic_0001>

<llo_original>
// kernel: tpu_custom_call.1
$region0: #{tpu_custom_call.1}
  #allocation0 [shape = 'u32[]', space=smem, size = 0x4, offset = 0x4, fixed_abs, tag = 'smem constant byte address 0x4 - core index']
  #allocation1 [shape = 'u32[144,128]{1,0:T(1,128)}', space=vmem, size = 0x12000, scoped, tag = 'internal scratch']
  %s0 = inlined_call_operand.vmem [shape: f32[8,2,32], index: 0, kind: input, shape index: {}]
  %s1 = inlined_call_operand.vmem [shape: f32[5000,1,32], index: 1, kind: input, shape index: {}]
  %s2 = inlined_call_operand.hbm [shape: f32[8,2,32], index: 2, kind: output, shape index: {}]
  %s3 = sld [smem:[#allocation0]]
  $region41: #{tpu_custom_call.1} parent=0
    _
  %s5 = ssub.s32 1, %s3
  %s6 = scalar_select 0, %s5, %s3
  $region1: #{tpu_custom_call.1} parent=0
    #allocation2 [shape = 'u8[2048]{0}', space=vmem, size = 0x800, scoped, tag = 'output window, operand 0']
    #allocation3 [shape = 's32[2]{0}', space=sflag, size = 0x8, scoped, tag = 'scoped memory for tpu_custom_call.1']
    %7 = vsyncpa [#allocation3], 0
    %s8 = scalar_lea.sflag [#allocation3], 1
    %9 = vsyncpa %s8, 0
    loop: start=0, step=1, limit=10
    $region2: #{tpu_custom_call.1} parent=1 // loop_pre_header
      _
    $region3: #{tpu_custom_call.1} parent=1 // loop_header
      %s11 = sphi 0, %s15
      %p12 = scmp.ge.s32.totalorder %s11, 10
      %s21 = sphi 0, %s23
      %s24 = sphi 0, %s21
      %s25 = sphi 0, %s24
      %s41 = sphi 0, %s25
      %s47 = sphi 0, %s49
      %s50 = sphi 0, %s47
      %s51 = sphi 0, %s50
      %s67 = sphi 0, %s51
      %s73 = sphi 0, %s75
      %s76 = sphi 0, %s73
      %s77 = sphi 0, %s76
      %s93 = sphi 0, %s77
    $region4: #{tpu_custom_call.1} parent=1 // loop_header_branch
      %14 = sbr.rel (%p12) target = $region8
    $region5: #{tpu_custom_call.1} parent=1 // loop_body
      %s16 = ssub.s32 %s11, 1
      %s17 = ssub.s32 %s11, 2
      %s18 = sadd.s32 %s11, 1
      %s19 = ssub.s32 %s11, %s18
      %p20 = scmp.eq.s32.totalorder %s19, 0
      %s22 = sadd.s32 %s21, 1
      %s23 = scalar_select %p20, %s21, %s22
      %p26 = pneg %p20
      %p27 = scmp.eq.s32.totalorder %s11, 7
      %p28 = por %p26, %p27
      %p29 = scmp.ne.s32.totalorder %s21, %s24
      %p30 = scmp.eq.s32.totalorder %s11, 0
      %p31 = por %p29, %p30
      %p32 = scmp.ne.s32.totalorder %s21, %s24
      %p33 = scmp.eq.s32.totalorder %s16, 7
      %p34 = por %p32, %p33
      %p35 = scmp.ne.s32.totalorder %s24, %s25
      %p36 = scmp.eq.s32.totalorder %s16, 0
      %p37 = por %p35, %p36
      %p38 = scmp.ne.s32.totalorder %s24, %s25
      %p39 = scmp.eq.s32.totalorder %s17, 7
      %p40 = por %p38, %p39
      %p42 = scmp.ne.s32.totalorder %s25, %s41
      %p43 = scmp.eq.s32.totalorder %s17, 0
      %p44 = por %p42, %p43
      %s45 = ssub.s32 %s11, %s18
      %p46 = scmp.eq.s32.totalorder %s45, 0
      %s48 = sadd.s32 %s47, 1
      %s49 = scalar_select %p46, %s47, %s48
      %p52 = pneg %p46
      %p53 = scmp.eq.s32.totalorder %s11, 7
      %p54 = por %p52, %p53
      %p55 = scmp.ne.s32.totalorder %s47, %s50
      %p56 = scmp.eq.s32.totalorder %s11, 0
      %p57 = por %p55, %p56
      %p58 = scmp.ne.s32.totalorder %s47, %s50
      %p59 = scmp.eq.s32.totalorder %s16, 7
      %p60 = por %p58, %p59
      %p61 = scmp.ne.s32.totalorder %s50, %s51
      %p62 = scmp.eq.s32.totalorder %s16, 0
      %p63 = por %p61, %p62
      %p64 = scmp.ne.s32.totalorder %s50, %s51
      %p65 = scmp.eq.s32.totalorder %s17, 7
      %p66 = por %p64, %p65
      %p68 = scmp.ne.s32.totalorder %s51, %s67
      %p69 = scmp.eq.s32.totalorder %s17, 0
      %p70 = por %p68, %p69
      %s71 = ssub.s32 %s11, %s18
      %p72 = scmp.eq.s32.totalorder %s71, 0
      %s74 = sadd.s32 %s73, 1
      %s75 = scalar_select %p72, %s73, %s74
      %p78 = pneg %p72
      %p79 = scmp.eq.s32.totalorder %s11, 7
      %p80 = por %p78, %p79
      %p81 = scmp.ne.s32.totalorder %s73, %s76
      %p82 = scmp.eq.s32.totalorder %s11, 0
      %p83 = por %p81, %p82
      %p84 = scmp.ne.s32.totalorder %s73, %s76
      %p85 = scmp.eq.s32.totalorder %s16, 7
      %p86 = por %p84, %p85
      %p87 = scmp.ne.s32.totalorder %s76, %s77
      %p88 = scmp.eq.s32.totalorder %s16, 0
      %p89 = por %p87, %p88
      %p90 = scmp.ne.s32.totalorder %s76, %s77
      %p91 = scmp.eq.s32.totalorder %s17, 7
      %p92 = por %p90, %p91
      %p94 = scmp.ne.s32.totalorder %s77, %s93
      %p95 = scmp.eq.s32.totalorder %s17, 0
      %p96 = por %p94, %p95
      %p97 = scmp.le.s32.totalorder 1, %s11
      %p98 = scmp.lt.s32.totalorder %s11, 9
      %p99 = pnand %p97, %p98
      %p100 = pneg %p99
      // Predicated region
      $region9: #{tpu_custom_call.1} parent=5 // pred_check
        _
      $region10: #{tpu_custom_call.1} parent=5 // pred_check_branch
        %102 = sbr.rel (%p99) target = $region12
      $region11: #{tpu_custom_call.1} parent=5 // pred_region
        %s103 = ssub.s32 %s11, 1
      $region12: #{tpu_custom_call.1} parent=5 // pred_fallthru
        _
      %p104 = scmp.lt.s32.totalorder %s11, 8
      // Predicated region
      $region13: #{tpu_custom_call.1} parent=5 // pred_check
        %p105 = pneg %p104
      $region14: #{tpu_custom_call.1} parent=5 // pred_check_branch
        %107 = sbr.rel (%p105) target = $region16
      $region15: #{tpu_custom_call.1} parent=5 // pred_region
        // Predicated region
        $region17: #{tpu_custom_call.1} parent=15 // pred_check
          %p108 = pneg %p31
        $region18: #{tpu_custom_call.1} parent=15 // pred_check_branch
          %110 = sbr.rel (%p108) target = $region20
        $region19: #{tpu_custom_call.1} parent=15 // pred_region
          %p111 = scmp.lt.s32.totalorder %s11, 7
          %s112 = scalar_select %p111, %s11, 7
          %s113 = smul.addr %s112, 2
          %s114 = scalar_lea.vmem %s0, %s113
        $region20: #{tpu_custom_call.1} parent=15 // pred_fallthru
          _
        // Predicated region
        $region21: #{tpu_custom_call.1} parent=15 // pred_check
          %p115 = pneg %p57
        $region22: #{tpu_custom_call.1} parent=15 // pred_check_branch
          %117 = sbr.rel (%p115) target = $region24
        $region23: #{tpu_custom_call.1} parent=15 // pred_region
          %p118 = scmp.lt.s32.totalorder %s11, 4999
          %s119 = scalar_select %p118, %s11, 4999
          %s120 = scalar_lea.vmem %s1, %s119
        $region24: #{tpu_custom_call.1} parent=15 // pred_fallthru
          _
      $region16: #{tpu_custom_call.1} parent=5 // pred_fallthru
        _
      %p121 = scmp.le.s32.totalorder 1, %s11
      %p122 = scmp.lt.s32.totalorder %s11, 9
      %p123 = pnand %p121, %p122
      %p124 = pneg %p123
      // Predicated region
      $region25: #{tpu_custom_call.1} parent=5 // pred_check
        _
      $region26: #{tpu_custom_call.1} parent=5 // pred_check_branch
        %126 = sbr.rel (%p123) target = $region28
      $region27: #{tpu_custom_call.1} parent=5 // pred_region
        %s127 = ssub.s32 %s11, 1
        %p128 = scmp.lt.s32.totalorder %s16, 7
        %s129 = scalar_select %p128, %s16, 7
        %s130 = smul.addr %s129, 2
        %s131 = scalar_lea.vmem %s0, %s130
        %p132 = pneg %p37
        %p133 = pneg %p34
        %p134 = scmp.lt.s32.totalorder %s16, 4999
        %s135 = scalar_select %p134, %s16, 4999
        %s136 = scalar_lea.vmem %s1, %s135
        %p137 = pneg %p63
        %p138 = pneg %p60
        %p139 = pneg %p89
        %p140 = pneg %p86
        %s141 = sand.u32 %s76, 1
        %s142 = scalar_lea.sflag [#allocation3], %s141
        %s143 = sand.u32 %s76, 1
        %s144 = smul.addr %s143, 2
        %s145 = scalar_lea.vmem [#allocation2], %s144
        %p146 = scmp.lt.s32.totalorder %s16, 7
        %s147 = scalar_select %p146, %s16, 7
        %s148 = smul.addr %s147, 2
        %s149 = scalar_lea.vmem %s0, %s148
        %p150 = scmp.lt.s32.totalorder %s16, 4999
        %s151 = scalar_select %p150, %s16, 4999
        %s152 = scalar_lea.vmem %s1, %s151
        %v153 = vld [vmem:[%s149] sm:$0x3]
        %v154 = vld [vmem:[%s152] sm:$0x1]
        %v156 = vlaneseq
        %v157 = vshrl.u32 %v156, 7
        %v158 = vsub.s32 0, %v157
        %v159 = vrot.slane %v154, %v158
        %v161 = vadd.f32 %v153, %v159
        %vm162 = vcmask 254976
        %163 = vst.msk [vmem:[%s145] sm:$0x3] %vm162, %v161
        %s164 = sand.u32 %s76, 1
        %s165 = scalar_lea.sflag [#allocation3], %s164
        %s166 = sand.u32 %s76, 1
        %s167 = smul.addr %s166, 2
        %s168 = scalar_lea.vmem [#allocation2], %s167
        // Predicated region
        $region29: #{tpu_custom_call.1} parent=27 // pred_check
          %p169 = pneg %p86
        $region30: #{tpu_custom_call.1} parent=27 // pred_check_branch
          %171 = sbr.rel (%p169) target = $region32
        $region31: #{tpu_custom_call.1} parent=27 // pred_region
          %s173 = ssub.s32 32, 32
          %174 = vsyncadd %s165, %s173
          %s175 = smul.addr %s16, 32
          %s176 = scalar_lea.hbm %s2, %s175
          %s178 = sshll.u32 %s168, 4
          %s179 = int_to_ptr.vmem [resolvable:$true] %s178
          %181 = dma.vmem_to_hbm [thread:$0]  %s179, 32, %s176, %s165
        $region32: #{tpu_custom_call.1} parent=27 // pred_fallthru
          _
      $region28: #{tpu_custom_call.1} parent=5 // pred_fallthru
        _
      %p182 = scmp.le.s32.totalorder 2, %s11
      // Predicated region
      $region33: #{tpu_custom_call.1} parent=5 // pred_check
        %p183 = pneg %p182
      $region34: #{tpu_custom_call.1} parent=5 // pred_check_branch
        %185 = sbr.rel (%p183) target = $region36
      $region35: #{tpu_custom_call.1} parent=5 // pred_region
        %s186 = ssub.s32 %s11, 2
        // Predicated region
        $region37: #{tpu_custom_call.1} parent=35 // pred_check
          %p187 = pneg %p92
        $region38: #{tpu_custom_call.1} parent=35 // pred_check_branch
          %189 = sbr.rel (%p187) target = $region40
        $region39: #{tpu_custom_call.1} parent=35 // pred_region
          %s190 = sand.u32 %s77, 1
          %s191 = scalar_lea.sflag [#allocation3], %s190
          %s192 = sand.u32 %s77, 1
          %s193 = smul.addr %s192, 2
          %s194 = scalar_lea.vmem [#allocation2], %s193
          %195 = dma.done %s191, 32
        $region40: #{tpu_custom_call.1} parent=35 // pred_fallthru
          _
      $region36: #{tpu_custom_call.1} parent=5 // pred_fallthru
        _
    $region6: #{tpu_custom_call.1} parent=1 // loop_footer
      %s15 = sadd.s32 1, %s11
    $region7: #{tpu_custom_call.1} parent=1 // loop_footer_branch
      %10 = sbr.rel target = $region3
    $region8: #{tpu_custom_call.1} parent=1 // loop_exit
      _
    %196 = vsyncpa [#allocation3], 1
    %s197 = scalar_lea.sflag [#allocation3], 1
    %198 = vsyncpa %s197, 1

</llo_original>
